<compile_context>
chip_gen: v7x
topology: tpu7x:2x2x1
jax: 0.10.0
libtpu: 0.0.40
codegen_flags: <defaults>
</compile_context>

<pallas_src>
import jax
import jax.numpy as jnp
from jax.experimental import pallas as pl
from jax.experimental.pallas import tpu as pltpu


# ----------------------------- Pallas kernel -----------------------------
def make_msp_kernel(inv_temp, latent):
    half = latent // 2

    def msp_kernel(
        x_ref, eps_ref,
        w_enc_ref, b_enc_ref, w_ml_ref, b_ml_ref,
        w_st_ref, b_st_ref, w_d1_ref, b_d1_ref, w_d2_ref, b_d2_ref,
        lat_ref, dec_ref,
    ):
        x = x_ref[...]
        eps = eps_ref[...]

        # ---- encoder: bf16 MXU operands, f32 accumulate, f32 elementwise ----
        h = jnp.tanh(
            jnp.dot(x.astype(jnp.bfloat16), w_enc_ref[...],
                    preferred_element_type=jnp.float32) + b_enc_ref[...])

        # Fused (mu | logvar) projection: one matmul, split lanes in-register.
        ml = jnp.dot(h.astype(jnp.bfloat16), w_ml_ref[...],
                     preferred_element_type=jnp.float32) + b_ml_ref[...]
        mu = ml[:, :latent]
        logvar = ml[:, latent:]

        # ---- reparameterization ----
        z = mu + jnp.exp(0.5 * logvar) * eps

        # ---- flow: affine coupling, fused (s | t) matmul ----
        # w_st / b_st are zero-padded on the host so that, driven by the FULL z:
        #   st[:, half:latent]            == z1 @ Ws + bs  (s, already in z2 lanes)
        #   st[:, latent+half:2*latent]   == z1 @ Wt + bt  (t, already in z2 lanes)
        # Unused lanes carry zeros and are masked by the where-blend below.
        st = jnp.dot(z.astype(jnp.bfloat16), w_st_ref[...],
                     preferred_element_type=jnp.float32) + b_st_ref[...]
        s_full = st[:, :latent]
        t_full = st[:, latent:]
        lane = jax.lax.broadcasted_iota(jnp.int32, z.shape, 1)
        flow_z = jnp.where(lane < half, z,
                           z * jnp.exp(jnp.tanh(s_full)) + t_full)

        # ---- packed latent outputs: [ mu | logvar | z | flow_z ] ----
        lat_ref[:, : 2 * latent] = ml
        lat_ref[:, 2 * latent: 3 * latent] = z
        lat_ref[:, 3 * latent:] = flow_z

        # ---- decoder + temperature softmax ----
        hd = jnp.tanh(
            jnp.dot(z.astype(jnp.bfloat16), w_d1_ref[...],
                    preferred_element_type=jnp.float32) + b_d1_ref[...])
        logits = jnp.dot(hd.astype(jnp.bfloat16), w_d2_ref[...],
                         preferred_element_type=jnp.float32) + b_d2_ref[...]
        scaled = logits * inv_temp
        m = jnp.max(scaled, axis=-1, keepdims=True)
        e = jnp.exp(scaled - m)
        dec_ref[...] = e * pl.reciprocal(jnp.sum(e, axis=-1, keepdims=True),
                                         approx=True)

    return msp_kernel


# ------------------------ host-side weight fusion -------------------------
def fuse_params(params):
    """Fuse (mu|logvar) and (s|t) projections; cast matmul weights to bf16."""
    latent = params["w_mu"].shape[-1]
    half = latent // 2
    f32, bf16 = jnp.float32, jnp.bfloat16

    w_ml = jnp.concatenate([params["w_mu"], params["w_lv"]], axis=1)
    b_ml = jnp.concatenate([params["b_mu"], params["b_lv"]], axis=1)

    # Zero-padded fused coupling weight, driven by the full z (rows half: are 0),
    # with s written to output lanes [half, latent) and t to [latent+half, 2*latent).
    w_st = jnp.zeros((latent, 2 * latent), f32)
    w_st = w_st.at[:half, half:latent].set(params["w_s"])
    w_st = w_st.at[:half, latent + half:].set(params["w_t"])
    b_st = jnp.zeros((1, 2 * latent), f32)
    b_st = b_st.at[:, half:latent].set(params["b_s"])
    b_st = b_st.at[:, latent + half:].set(params["b_t"])

    return (
        params["w_enc"].astype(bf16), params["b_enc"].astype(f32),
        w_ml.astype(bf16),            b_ml.astype(f32),
        w_st.astype(bf16),            b_st.astype(f32),
        params["w_d1"].astype(bf16),  params["b_d1"].astype(f32),
        params["w_d2"].astype(bf16),  params["b_d2"].astype(f32),
    )


# ------------------------------- wrapper ---------------------------------
def msp_forward(x, eps, params, temperature=1.0, block_b=8):
    B, d_in = x.shape
    latent = eps.shape[-1]
    d_out = params["w_d2"].shape[-1]
    assert B % block_b == 0, "batch must be a multiple of the batch tile"

    weights = fuse_params(params)
    kernel = make_msp_kernel(float(1.0 / temperature), latent)

    row = lambda i: (i, 0)   # batch-tiled arrays
    pin = lambda i: (0, 0)   # weights stay VMEM-resident across grid steps

    in_specs = [
        pl.BlockSpec((block_b, d_in), row),
        pl.BlockSpec((block_b, latent), row),
    ] + [pl.BlockSpec(w.shape, pin) for w in weights]

    out_specs = (
        pl.BlockSpec((block_b, 4 * latent), row),   # packed [mu|logvar|z|flow_z]
        pl.BlockSpec((block_b, d_out), row),        # decoded
    )
    out_shape = (
        jax.ShapeDtypeStruct((B, 4 * latent), jnp.float32),
        jax.ShapeDtypeStruct((B, d_out), jnp.float32),
    )

    packed, decoded = pl.pallas_call(
        kernel,
        out_shape=out_shape,
        grid_spec=pltpu.PrefetchScalarGridSpec(
            num_scalar_prefetch=0,
            grid=(B // block_b,),
            in_specs=in_specs,
            out_specs=out_specs,
        ),
        compiler_params=pltpu.CompilerParams(
            dimension_semantics=("parallel",),
        ),
    )(x, eps, *weights)

    mu = packed[:, :latent]
    logvar = packed[:, latent:2 * latent]
    z = packed[:, 2 * latent:3 * latent]
    flow_z = packed[:, 3 * latent:]
    return mu, logvar, z, flow_z, decoded


# --------------------------- pure-JAX reference ---------------------------
def msp_reference(x, eps, params, temperature=1.0):
    h = jnp.tanh(x @ params["w_enc"] + params["b_enc"])
    mu = h @ params["w_mu"] + params["b_mu"]
    logvar = h @ params["w_lv"] + params["b_lv"]
    z = mu + jnp.exp(0.5 * logvar) * eps
    half = z.shape[-1] // 2
    z1, z2 = z[:, :half], z[:, half:]
    s = jnp.tanh(z1 @ params["w_s"] + params["b_s"])
    t = z1 @ params["w_t"] + params["b_t"]
    flow_z = jnp.concatenate([z1, z2 * jnp.exp(s) + t], axis=-1)
    hd = jnp.tanh(z @ params["w_d1"] + params["b_d1"])
    logits = hd @ params["w_d2"] + params["b_d2"]
    decoded = jax.nn.softmax(logits / temperature, axis=-1)
    return mu, logvar, z, flow_z, decoded


# ------------------------------ param init --------------------------------
def init_params(key, d_in, hidden, latent, d_out):
    ks = jax.random.split(key, 7)
    half = latent // 2
    scale = 0.1

    def w(k, shape):
        return (scale * jax.random.normal(k, shape)).astype(jnp.float32)

    return {
        "w_enc": w(ks[0], (d_in, hidden)), "b_enc": jnp.zeros((1, hidden), jnp.float32),
        "w_mu":  w(ks[1], (hidden, latent)), "b_mu": jnp.zeros((1, latent), jnp.float32),
        "w_lv":  w(ks[2], (hidden, latent)), "b_lv": jnp.zeros((1, latent), jnp.float32),
        "w_s":   w(ks[3], (half, half)),     "b_s":  jnp.zeros((1, half), jnp.float32),
        "w_t":   w(ks[4], (half, half)),     "b_t":  jnp.zeros((1, half), jnp.float32),
        "w_d1":  w(ks[5], (latent, hidden)), "b_d1": jnp.zeros((1, hidden), jnp.float32),
        "w_d2":  w(ks[6], (hidden, d_out)),  "b_d2": jnp.zeros((1, d_out), jnp.float32),
    }


if __name__ == "__main__":
    # Small CharVAE-ish shapes: batch=16, seq=8, vocab=4 -> d_in = 32.
    B, SEQ, VOCAB = 16, 8, 4
    D_IN = SEQ * VOCAB          # 32
    HIDDEN = 32
    LATENT = 16
    D_OUT = D_IN
    LABEL_SIZE = 4              # stored by MSP.__init__, unused in forward
    TEMPERATURE = 1.0
    BLOCK_B = 8                 # batch tile; grid=(B // BLOCK_B,), "parallel"

    key = jax.random.PRNGKey(0)
    k_x, k_eps, k_p = jax.random.split(key, 3)

    x = jax.random.normal(k_x, (B, D_IN), dtype=jnp.float32)
    eps = jax.random.normal(k_eps, (B, LATENT), dtype=jnp.float32)
    params = init_params(k_p, D_IN, HIDDEN, LATENT, D_OUT)

    outs = msp_forward(x, eps, params, TEMPERATURE, block_b=BLOCK_B)
    outs = jax.block_until_ready(outs)

    # Tolerance is loosened vs. the previous all-f32 kernel because the MXU now
    # takes bf16 operands (f32 accumulate) and the softmax uses an approximate
    # (EUP) reciprocal; observed deviations are well inside these bounds.
    refs = msp_reference(x, eps, params, TEMPERATURE)
    for o, r in zip(outs, refs):
        assert o.shape == r.shape and o.dtype == r.dtype
        assert jnp.allclose(o, r, atol=5e-2, rtol=5e-2), "mismatch vs reference"

    print("KERNEL_OK")
</pallas_src>

<mosaic_0001>
module attributes {stable_mosaic.version = 11 : i64} {
  func.func @msp_kernel(%arg0: i32, %arg1: memref<8x32xf32, #tpu.memory_space<vmem>>, %arg2: memref<8x16xf32, #tpu.memory_space<vmem>>, %arg3: memref<32x32xbf16, #tpu.memory_space<vmem>>, %arg4: memref<1x32xf32, #tpu.memory_space<vmem>>, %arg5: memref<32x32xbf16, #tpu.memory_space<vmem>>, %arg6: memref<1x32xf32, #tpu.memory_space<vmem>>, %arg7: memref<16x32xbf16, #tpu.memory_space<vmem>>, %arg8: memref<1x32xf32, #tpu.memory_space<vmem>>, %arg9: memref<16x32xbf16, #tpu.memory_space<vmem>>, %arg10: memref<1x32xf32, #tpu.memory_space<vmem>>, %arg11: memref<32x32xbf16, #tpu.memory_space<vmem>>, %arg12: memref<1x32xf32, #tpu.memory_space<vmem>>, %arg13: memref<8x64xf32, #tpu.memory_space<vmem>>, %arg14: memref<8x32xf32, #tpu.memory_space<vmem>>) attributes {dimension_semantics = [#tpu.dimension_semantics<parallel>], iteration_bounds = array<i64: 2>, scalar_prefetch = 0 : i64, scratch_operands = 0 : i64, tpu.core_type = #tpu.core_type<tc>, window_params = [{transform_indices = @transform_0, window_bounds = array<i64: 8, 32>}, {transform_indices = @transform_1, window_bounds = array<i64: 8, 16>}, {pipeline_mode = #tpu.pipeline_mode<synchronous>, transform_indices = @transform_2, window_bounds = array<i64: 32, 32>}, {pipeline_mode = #tpu.pipeline_mode<synchronous>, transform_indices = @transform_3, window_bounds = array<i64: 1, 32>}, {pipeline_mode = #tpu.pipeline_mode<synchronous>, transform_indices = @transform_4, window_bounds = array<i64: 32, 32>}, {pipeline_mode = #tpu.pipeline_mode<synchronous>, transform_indices = @transform_5, window_bounds = array<i64: 1, 32>}, {pipeline_mode = #tpu.pipeline_mode<synchronous>, transform_indices = @transform_6, window_bounds = array<i64: 16, 32>}, {pipeline_mode = #tpu.pipeline_mode<synchronous>, transform_indices = @transform_7, window_bounds = array<i64: 1, 32>}, {pipeline_mode = #tpu.pipeline_mode<synchronous>, transform_indices = @transform_8, window_bounds = array<i64: 16, 32>}, {pipeline_mode = #tpu.pipeline_mode<synchronous>, transform_indices = @transform_9, window_bounds = array<i64: 1, 32>}, {pipeline_mode = #tpu.pipeline_mode<synchronous>, transform_indices = @transform_10, window_bounds = array<i64: 32, 32>}, {pipeline_mode = #tpu.pipeline_mode<synchronous>, transform_indices = @transform_11, window_bounds = array<i64: 1, 32>}, {transform_indices = @transform_12, window_bounds = array<i64: 8, 64>}, {transform_indices = @transform_13, window_bounds = array<i64: 8, 32>}]} {
    %c0 = arith.constant 0 : index
    %c0_0 = arith.constant 0 : index
    %0 = vector.load %arg1[%c0, %c0_0] : memref<8x32xf32, #tpu.memory_space<vmem>>, vector<8x32xf32>
    %c0_1 = arith.constant 0 : index
    %c0_2 = arith.constant 0 : index
    %1 = vector.load %arg2[%c0_1, %c0_2] : memref<8x16xf32, #tpu.memory_space<vmem>>, vector<8x16xf32>
    %2 = arith.truncf %0 : vector<8x32xf32> to vector<8x32xbf16>
    %c0_3 = arith.constant 0 : index
    %c0_4 = arith.constant 0 : index
    %3 = vector.load %arg3[%c0_3, %c0_4] : memref<32x32xbf16, #tpu.memory_space<vmem>>, vector<32x32xbf16>
    %cst = arith.constant dense<0.000000e+00> : vector<8x32xf32>
    %4 = tpu.matmul %2, %3, %cst {dimension_numbers = #tpu.dot_dimension_numbers<[1], [0], [0], [1], [0, 0, 1, 1], [], []>} : vector<8x32xbf16>, vector<32x32xbf16>, vector<8x32xf32> -> vector<8x32xf32>
    %c0_5 = arith.constant 0 : index
    %c0_6 = arith.constant 0 : index
    %5 = vector.load %arg4[%c0_5, %c0_6] : memref<1x32xf32, #tpu.memory_space<vmem>>, vector<1x32xf32>
    %6 = vector.broadcast %5 : vector<1x32xf32> to vector<8x32xf32>
    %7 = arith.addf %4, %6 : vector<8x32xf32>
    %8 = math.tanh %7 : vector<8x32xf32>
    %9 = arith.truncf %8 : vector<8x32xf32> to vector<8x32xbf16>
    %c0_7 = arith.constant 0 : index
    %c0_8 = arith.constant 0 : index
    %10 = vector.load %arg5[%c0_7, %c0_8] : memref<32x32xbf16, #tpu.memory_space<vmem>>, vector<32x32xbf16>
    %cst_9 = arith.constant dense<0.000000e+00> : vector<8x32xf32>
    %11 = tpu.matmul %9, %10, %cst_9 {dimension_numbers = #tpu.dot_dimension_numbers<[1], [0], [0], [1], [0, 0, 1, 1], [], []>} : vector<8x32xbf16>, vector<32x32xbf16>, vector<8x32xf32> -> vector<8x32xf32>
    %c0_10 = arith.constant 0 : index
    %c0_11 = arith.constant 0 : index
    %12 = vector.load %arg6[%c0_10, %c0_11] : memref<1x32xf32, #tpu.memory_space<vmem>>, vector<1x32xf32>
    %13 = vector.broadcast %12 : vector<1x32xf32> to vector<8x32xf32>
    %14 = arith.addf %11, %13 : vector<8x32xf32>
    %15 = vector.extract_strided_slice %14 {offsets = [0, 0], sizes = [8, 16], strides = [1, 1]} : vector<8x32xf32> to vector<8x16xf32>
    %16 = vector.extract_strided_slice %14 {offsets = [0, 16], sizes = [8, 16], strides = [1, 1]} : vector<8x32xf32> to vector<8x16xf32>
    %cst_12 = arith.constant 5.000000e-01 : f32
    %17 = vector.broadcast %cst_12 : f32 to vector<8x16xf32>
    %18 = arith.mulf %17, %16 : vector<8x16xf32>
    %19 = math.exp %18 : vector<8x16xf32>
    %20 = arith.mulf %19, %1 : vector<8x16xf32>
    %21 = arith.addf %15, %20 : vector<8x16xf32>
    %22 = arith.truncf %21 : vector<8x16xf32> to vector<8x16xbf16>
    %c0_13 = arith.constant 0 : index
    %c0_14 = arith.constant 0 : index
    %23 = vector.load %arg7[%c0_13, %c0_14] : memref<16x32xbf16, #tpu.memory_space<vmem>>, vector<16x32xbf16>
    %cst_15 = arith.constant dense<0.000000e+00> : vector<8x32xf32>
    %24 = tpu.matmul %22, %23, %cst_15 {dimension_numbers = #tpu.dot_dimension_numbers<[1], [0], [0], [1], [0, 0, 1, 1], [], []>} : vector<8x16xbf16>, vector<16x32xbf16>, vector<8x32xf32> -> vector<8x32xf32>
    %c0_16 = arith.constant 0 : index
    %c0_17 = arith.constant 0 : index
    %25 = vector.load %arg8[%c0_16, %c0_17] : memref<1x32xf32, #tpu.memory_space<vmem>>, vector<1x32xf32>
    %26 = vector.broadcast %25 : vector<1x32xf32> to vector<8x32xf32>
    %27 = arith.addf %24, %26 : vector<8x32xf32>
    %28 = vector.extract_strided_slice %27 {offsets = [0, 0], sizes = [8, 16], strides = [1, 1]} : vector<8x32xf32> to vector<8x16xf32>
    %29 = vector.extract_strided_slice %27 {offsets = [0, 16], sizes = [8, 16], strides = [1, 1]} : vector<8x32xf32> to vector<8x16xf32>
    %30 = tpu.iota {dimensions = array<i32: 1>} : vector<8x16xi32>
    %c8_i32 = arith.constant 8 : i32
    %31 = vector.broadcast %c8_i32 : i32 to vector<8x16xi32>
    %32 = arith.cmpi slt, %30, %31 : vector<8x16xi32>
    %33 = math.tanh %28 : vector<8x16xf32>
    %34 = math.exp %33 : vector<8x16xf32>
    %35 = arith.mulf %21, %34 : vector<8x16xf32>
    %36 = arith.addf %35, %29 : vector<8x16xf32>
    %37 = arith.select %32, %21, %36 : vector<8x16xi1>, vector<8x16xf32>
    %c0_18 = arith.constant 0 : index
    %c0_19 = arith.constant 0 : index
    %38 = vector.load %arg13[%c0_18, %c0_19] : memref<8x64xf32, #tpu.memory_space<vmem>>, vector<8x32xf32>
    tpu.vector_store %arg13[%c0_18, %c0_19], %14 {strides = array<i32>} : memref<8x64xf32, #tpu.memory_space<vmem>>, vector<8x32xf32>,
    %c0_20 = arith.constant 0 : index
    %c32 = arith.constant 32 : index
    %39 = vector.load %arg13[%c0_20, %c32] : memref<8x64xf32, #tpu.memory_space<vmem>>, vector<8x16xf32>
    tpu.vector_store %arg13[%c0_20, %c32], %21 {strides = array<i32>} : memref<8x64xf32, #tpu.memory_space<vmem>>, vector<8x16xf32>,
    %c0_21 = arith.constant 0 : index
    %c48 = arith.constant 48 : index
    %40 = vector.load %arg13[%c0_21, %c48] : memref<8x64xf32, #tpu.memory_space<vmem>>, vector<8x16xf32>
    tpu.vector_store %arg13[%c0_21, %c48], %37 {strides = array<i32>} : memref<8x64xf32, #tpu.memory_space<vmem>>, vector<8x16xf32>,
    %41 = arith.truncf %21 : vector<8x16xf32> to vector<8x16xbf16>
    %c0_22 = arith.constant 0 : index
    %c0_23 = arith.constant 0 : index
    %42 = vector.load %arg9[%c0_22, %c0_23] : memref<16x32xbf16, #tpu.memory_space<vmem>>, vector<16x32xbf16>
    %cst_24 = arith.constant dense<0.000000e+00> : vector<8x32xf32>
    %43 = tpu.matmul %41, %42, %cst_24 {dimension_numbers = #tpu.dot_dimension_numbers<[1], [0], [0], [1], [0, 0, 1, 1], [], []>} : vector<8x16xbf16>, vector<16x32xbf16>, vector<8x32xf32> -> vector<8x32xf32>
    %c0_25 = arith.constant 0 : index
    %c0_26 = arith.constant 0 : index
    %44 = vector.load %arg10[%c0_25, %c0_26] : memref<1x32xf32, #tpu.memory_space<vmem>>, vector<1x32xf32>
    %45 = vector.broadcast %44 : vector<1x32xf32> to vector<8x32xf32>
    %46 = arith.addf %43, %45 : vector<8x32xf32>
    %47 = math.tanh %46 : vector<8x32xf32>
    %48 = arith.truncf %47 : vector<8x32xf32> to vector<8x32xbf16>
    %c0_27 = arith.constant 0 : index
    %c0_28 = arith.constant 0 : index
    %49 = vector.load %arg11[%c0_27, %c0_28] : memref<32x32xbf16, #tpu.memory_space<vmem>>, vector<32x32xbf16>
    %cst_29 = arith.constant dense<0.000000e+00> : vector<8x32xf32>
    %50 = tpu.matmul %48, %49, %cst_29 {dimension_numbers = #tpu.dot_dimension_numbers<[1], [0], [0], [1], [0, 0, 1, 1], [], []>} : vector<8x32xbf16>, vector<32x32xbf16>, vector<8x32xf32> -> vector<8x32xf32>
    %c0_30 = arith.constant 0 : index
    %c0_31 = arith.constant 0 : index
    %51 = vector.load %arg12[%c0_30, %c0_31] : memref<1x32xf32, #tpu.memory_space<vmem>>, vector<1x32xf32>
    %52 = vector.broadcast %51 : vector<1x32xf32> to vector<8x32xf32>
    %53 = arith.addf %50, %52 : vector<8x32xf32>
    %cst_32 = arith.constant 1.000000e+00 : f32
    %54 = vector.broadcast %cst_32 : f32 to vector<8x32xf32>
    %55 = arith.mulf %53, %54 : vector<8x32xf32>
    %cst_33 = arith.constant dense<0xFF800000> : vector<8xf32>
    %56 = vector.multi_reduction <maximumf>, %55, %cst_33 [1] : vector<8x32xf32> to vector<8xf32>
    %57 = vector.shape_cast %56 : vector<8xf32> to vector<8x1xf32>
    %58 = vector.broadcast %57 : vector<8x1xf32> to vector<8x32xf32>
    %59 = arith.subf %55, %58 : vector<8x32xf32>
    %60 = math.exp %59 : vector<8x32xf32>
    %cst_34 = arith.constant dense<0.000000e+00> : vector<8xf32>
    %61 = vector.multi_reduction <add>, %60, %cst_34 [1] : vector<8x32xf32> to vector<8xf32>
    %62 = vector.shape_cast %61 : vector<8xf32> to vector<8x1xf32>
    %63 = tpu.reciprocal %62 {approx = true} : vector<8x1xf32> -> vector<8x1xf32>
    %64 = vector.broadcast %63 : vector<8x1xf32> to vector<8x32xf32>
    %65 = arith.mulf %60, %64 : vector<8x32xf32>
    %c0_35 = arith.constant 0 : index
    %c0_36 = arith.constant 0 : index
    %66 = vector.load %arg14[%c0_35, %c0_36] : memref<8x32xf32, #tpu.memory_space<vmem>>, vector<8x32xf32>
    tpu.vector_store %arg14[%c0_35, %c0_36], %65 {strides = array<i32>} : memref<8x32xf32, #tpu.memory_space<vmem>>, vector<8x32xf32>,
    return
  }
  func.func @transform_0(%arg0: i32) -> (i32, i32) {
    %c0_i32 = arith.constant 0 : i32
    %c0_i32_0 = arith.constant 0 : i32
    return %arg0, %c0_i32 : i32, i32
  }
  func.func @transform_1(%arg0: i32) -> (i32, i32) {
    %c0_i32 = arith.constant 0 : i32
    %c0_i32_0 = arith.constant 0 : i32
    return %arg0, %c0_i32 : i32, i32
  }
  func.func @transform_2(%arg0: i32) -> (i32, i32) {
    %c0_i32 = arith.constant 0 : i32
    %c0_i32_0 = arith.constant 0 : i32
    %c0_i32_1 = arith.constant 0 : i32
    return %c0_i32, %c0_i32_0 : i32, i32
  }
  func.func @transform_3(%arg0: i32) -> (i32, i32) {
    %c0_i32 = arith.constant 0 : i32
    %c0_i32_0 = arith.constant 0 : i32
    %c0_i32_1 = arith.constant 0 : i32
    return %c0_i32, %c0_i32_0 : i32, i32
  }
  func.func @transform_4(%arg0: i32) -> (i32, i32) {
    %c0_i32 = arith.constant 0 : i32
    %c0_i32_0 = arith.constant 0 : i32
    %c0_i32_1 = arith.constant 0 : i32
    return %c0_i32, %c0_i32_0 : i32, i32
  }
  func.func @transform_5(%arg0: i32) -> (i32, i32) {
    %c0_i32 = arith.constant 0 : i32
    %c0_i32_0 = arith.constant 0 : i32
    %c0_i32_1 = arith.constant 0 : i32
    return %c0_i32, %c0_i32_0 : i32, i32
  }
  func.func @transform_6(%arg0: i32) -> (i32, i32) {
    %c0_i32 = arith.constant 0 : i32
    %c0_i32_0 = arith.constant 0 : i32
    %c0_i32_1 = arith.constant 0 : i32
    return %c0_i32, %c0_i32_0 : i32, i32
  }
  func.func @transform_7(%arg0: i32) -> (i32, i32) {
    %c0_i32 = arith.constant 0 : i32
    %c0_i32_0 = arith.constant 0 : i32
    %c0_i32_1 = arith.constant 0 : i32
    return %c0_i32, %c0_i32_0 : i32, i32
  }
  func.func @transform_8(%arg0: i32) -> (i32, i32) {
    %c0_i32 = arith.constant 0 : i32
    %c0_i32_0 = arith.constant 0 : i32
    %c0_i32_1 = arith.constant 0 : i32
    return %c0_i32, %c0_i32_0 : i32, i32
  }
  func.func @transform_9(%arg0: i32) -> (i32, i32) {
    %c0_i32 = arith.constant 0 : i32
    %c0_i32_0 = arith.constant 0 : i32
    %c0_i32_1 = arith.constant 0 : i32
    return %c0_i32, %c0_i32_0 : i32, i32
  }
  func.func @transform_10(%arg0: i32) -> (i32, i32) {
    %c0_i32 = arith.constant 0 : i32
    %c0_i32_0 = arith.constant 0 : i32
    %c0_i32_1 = arith.constant 0 : i32
    return %c0_i32, %c0_i32_0 : i32, i32
  }
  func.func @transform_11(%arg0: i32) -> (i32, i32) {
    %c0_i32 = arith.constant 0 : i32
    %c0_i32_0 = arith.constant 0 : i32
    %c0_i32_1 = arith.constant 0 : i32
    return %c0_i32, %c0_i32_0 : i32, i32
  }
  func.func @transform_12(%arg0: i32) -> (i32, i32) {
    %c0_i32 = arith.constant 0 : i32
    %c0_i32_0 = arith.constant 0 : i32
    return %arg0, %c0_i32 : i32, i32
  }
  func.func @transform_13(%arg0: i32) -> (i32, i32) {
    %c0_i32 = arith.constant 0 : i32
    %c0_i32_0 = arith.constant 0 : i32
    return %arg0, %c0_i32 : i32, i32
  }
}

</mosaic_0001>

<llo_original>
// kernel: tpu_custom_call.1
$region0: #{tpu_custom_call.1}
  #allocation0 [shape = 'u32[]', space=smem, size = 0x4, offset = 0x4, fixed_abs, tag = 'smem constant byte address 0x4 - core index']
  #allocation1 [shape = 'u32[144,128]{1,0:T(1,128)}', space=vmem, size = 0x12000, scoped, tag = 'internal scratch']
  %s0 = inlined_call_operand.hbm [shape: f32[16,32], index: 0, kind: input, shape index: {}]
  %s1 = inlined_call_operand.hbm [shape: f32[16,16], index: 1, kind: input, shape index: {}]
  %s2 = inlined_call_operand.hbm [shape: bf16[32,32], index: 2, kind: input, shape index: {}]
  %s3 = inlined_call_operand.vmem [shape: f32[1,32], index: 3, kind: input, shape index: {}]
  %s4 = inlined_call_operand.hbm [shape: bf16[32,32], index: 4, kind: input, shape index: {}]
  %s5 = inlined_call_operand.vmem [shape: f32[1,32], index: 5, kind: input, shape index: {}]
  %s6 = inlined_call_operand.vmem [shape: bf16[16,32], index: 6, kind: input, shape index: {}]
  %s7 = inlined_call_operand.vmem [shape: f32[1,32], index: 7, kind: input, shape index: {}]
  %s8 = inlined_call_operand.hbm [shape: bf16[16,32], index: 8, kind: input, shape index: {}]
  %s9 = inlined_call_operand.vmem [shape: f32[1,32], index: 9, kind: input, shape index: {}]
  %s10 = inlined_call_operand.vmem [shape: bf16[32,32], index: 10, kind: input, shape index: {}]
  %s11 = inlined_call_operand.vmem [shape: f32[1,32], index: 11, kind: input, shape index: {}]
  %s12 = inlined_call_operand.hbm [shape: f32[16,64], index: 12, kind: output, shape index: {0}]
  %s13 = inlined_call_operand.hbm [shape: f32[16,32], index: 13, kind: output, shape index: {1}]
  %14 = xla_tuple %s12, %s13
  %s15 = sld [smem:[#allocation0]]
  $region109: #{tpu_custom_call.1} parent=0
    _
  %s17 = ssub.s32 1, %s15
  %s18 = scalar_select 0, %s17, %s15
  $region1: #{tpu_custom_call.1} parent=0
    #allocation2 [shape = 'u8[8192]{0}', space=vmem, size = 0x2000, scoped, tag = 'input window, operand 0']
    #allocation3 [shape = 's32[2]{0}', space=sflag, size = 0x8, scoped, tag = 'scoped memory for tpu_custom_call.1']
    #allocation4 [shape = 's32[2]{0}', space=sflag, size = 0x8, scoped, tag = 'scoped memory for tpu_custom_call.1']
    #allocation5 [shape = 'u8[8192]{0}', space=vmem, size = 0x2000, scoped, tag = 'input window, operand 1']
    #allocation6 [shape = 's32[2]{0}', space=sflag, size = 0x8, scoped, tag = 'scoped memory for tpu_custom_call.1']
    #allocation7 [shape = 'u8[8192]{0}', space=vmem, size = 0x2000, scoped, tag = 'input window, operand 2, single buffered']
    #allocation8 [shape = 'u8[8192]{0}', space=vmem, size = 0x2000, scoped, tag = 'input window, operand 4, single buffered']
    #allocation9 [shape = 's32[1]{0}', space=sflag, size = 0x4, scoped, tag = 'scoped memory for tpu_custom_call.1']
    #allocation10 [shape = 'u8[4096]{0}', space=vmem, size = 0x1000, scoped, tag = 'input window, operand 8, single buffered']
    #allocation11 [shape = 'u8[8192]{0}', space=vmem, size = 0x2000, scoped, tag = 'output window, operand 0']
    #allocation12 [shape = 'u8[8192]{0}', space=vmem, size = 0x2000, scoped, tag = 'output window, operand 1']
    #allocation13 [shape = 's32[2]{0}', space=sflag, size = 0x8, scoped, tag = 'scoped memory for tpu_custom_call.1']
    %19 = vsyncpa [#allocation3], 0
    %s20 = scalar_lea.sflag [#allocation3], 1
    %21 = vsyncpa %s20, 0
    %22 = vsyncpa [#allocation6], 0
    %s23 = scalar_lea.sflag [#allocation6], 1
    %24 = vsyncpa %s23, 0
    %25 = vsyncpa [#allocation9], 0
    %26 = vsyncpa [#allocation4], 0
    %s27 = scalar_lea.sflag [#allocation4], 1
    %28 = vsyncpa %s27, 0
    %29 = vsyncpa [#allocation13], 0
    %s30 = scalar_lea.sflag [#allocation13], 1
    %31 = vsyncpa %s30, 0
    loop: start=0, step=1, limit=4
    $region2: #{tpu_custom_call.1} parent=1 // loop_pre_header
      _
    $region3: #{tpu_custom_call.1} parent=1 // loop_header
      %s33 = sphi 0, %s37
      %p34 = scmp.ge.s32.totalorder %s33, 4
      %s43 = sphi 0, %s45
      %s46 = sphi 0, %s43
      %s47 = sphi 0, %s46
      %s63 = sphi 0, %s47
      %s69 = sphi 0, %s71
      %s72 = sphi 0, %s69
      %s73 = sphi 0, %s72
      %s89 = sphi 0, %s73
      %s93 = sphi 0, %s93
      %s95 = sphi 0, %s93
      %s96 = sphi 0, %s95
      %s110 = sphi 0, %s96
      %s114 = sphi 0, %s114
      %s116 = sphi 0, %s114
      %s117 = sphi 0, %s116
      %s131 = sphi 0, %s117
      %s135 = sphi 0, %s135
      %s137 = sphi 0, %s135
      %s138 = sphi 0, %s137
      %s152 = sphi 0, %s138
      %s156 = sphi 0, %s156
      %s158 = sphi 0, %s156
      %s159 = sphi 0, %s158
      %s173 = sphi 0, %s159
      %s177 = sphi 0, %s177
      %s179 = sphi 0, %s177
      %s180 = sphi 0, %s179
      %s194 = sphi 0, %s180
      %s198 = sphi 0, %s198
      %s200 = sphi 0, %s198
      %s201 = sphi 0, %s200
      %s215 = sphi 0, %s201
      %s219 = sphi 0, %s219
      %s221 = sphi 0, %s219
      %s222 = sphi 0, %s221
      %s236 = sphi 0, %s222
      %s240 = sphi 0, %s240
      %s242 = sphi 0, %s240
      %s243 = sphi 0, %s242
      %s257 = sphi 0, %s243
      %s261 = sphi 0, %s261
      %s263 = sphi 0, %s261
      %s264 = sphi 0, %s263
      %s278 = sphi 0, %s264
      %s282 = sphi 0, %s282
      %s284 = sphi 0, %s282
      %s285 = sphi 0, %s284
      %s299 = sphi 0, %s285
      %s305 = sphi 0, %s307
      %s308 = sphi 0, %s305
      %s309 = sphi 0, %s308
      %s325 = sphi 0, %s309
      %s331 = sphi 0, %s333
      %s334 = sphi 0, %s331
      %s335 = sphi 0, %s334
      %s351 = sphi 0, %s335
    $region4: #{tpu_custom_call.1} parent=1 // loop_header_branch
      %36 = sbr.rel (%p34) target = $region8
    $region5: #{tpu_custom_call.1} parent=1 // loop_body
      %s38 = ssub.s32 %s33, 1
      %s39 = ssub.s32 %s33, 2
      %s40 = sadd.s32 %s33, 1
      %s41 = ssub.s32 %s33, %s40
      %p42 = scmp.eq.s32.totalorder %s41, 0
      %s44 = sadd.s32 %s43, 1
      %s45 = scalar_select %p42, %s43, %s44
      %p48 = pneg %p42
      %p49 = scmp.eq.s32.totalorder %s33, 1
      %p50 = por %p48, %p49
      %p51 = scmp.ne.s32.totalorder %s43, %s46
      %p52 = scmp.eq.s32.totalorder %s33, 0
      %p53 = por %p51, %p52
      %p54 = scmp.ne.s32.totalorder %s43, %s46
      %p55 = scmp.eq.s32.totalorder %s38, 1
      %p56 = por %p54, %p55
      %p57 = scmp.ne.s32.totalorder %s46, %s47
      %p58 = scmp.eq.s32.totalorder %s38, 0
      %p59 = por %p57, %p58
      %p60 = scmp.ne.s32.totalorder %s46, %s47
      %p61 = scmp.eq.s32.totalorder %s39, 1
      %p62 = por %p60, %p61
      %p64 = scmp.ne.s32.totalorder %s47, %s63
      %p65 = scmp.eq.s32.totalorder %s39, 0
      %p66 = por %p64, %p65
      %s67 = ssub.s32 %s33, %s40
      %p68 = scmp.eq.s32.totalorder %s67, 0
      %s70 = sadd.s32 %s69, 1
      %s71 = scalar_select %p68, %s69, %s70
      %p74 = pneg %p68
      %p75 = scmp.eq.s32.totalorder %s33, 1
      %p76 = por %p74, %p75
      %p77 = scmp.ne.s32.totalorder %s69, %s72
      %p78 = scmp.eq.s32.totalorder %s33, 0
      %p79 = por %p77, %p78
      %p80 = scmp.ne.s32.totalorder %s69, %s72
      %p81 = scmp.eq.s32.totalorder %s38, 1
      %p82 = por %p80, %p81
      %p83 = scmp.ne.s32.totalorder %s72, %s73
      %p84 = scmp.eq.s32.totalorder %s38, 0
      %p85 = por %p83, %p84
      %p86 = scmp.ne.s32.totalorder %s72, %s73
      %p87 = scmp.eq.s32.totalorder %s39, 1
      %p88 = por %p86, %p87
      %p90 = scmp.ne.s32.totalorder %s73, %s89
      %p91 = scmp.eq.s32.totalorder %s39, 0
      %p92 = por %p90, %p91
      %s94 = sadd.s32 %s93, 1
      %p97 = scmp.eq.s32.totalorder %s33, 1
      %p98 = scmp.ne.s32.totalorder %s93, %s95
      %p99 = scmp.eq.s32.totalorder %s33, 0
      %p100 = por %p98, %p99
      %p101 = scmp.ne.s32.totalorder %s93, %s95
      %p102 = scmp.eq.s32.totalorder %s38, 1
      %p103 = por %p101, %p102
      %p104 = scmp.ne.s32.totalorder %s95, %s96
      %p105 = scmp.eq.s32.totalorder %s38, 0
      %p106 = por %p104, %p105
      %p107 = scmp.ne.s32.totalorder %s95, %s96
      %p108 = scmp.eq.s32.totalorder %s39, 1
      %p109 = por %p107, %p108
      %p111 = scmp.ne.s32.totalorder %s96, %s110
      %p112 = scmp.eq.s32.totalorder %s39, 0
      %p113 = por %p111, %p112
      %s115 = sadd.s32 %s114, 1
      %p118 = scmp.eq.s32.totalorder %s33, 1
      %p119 = scmp.ne.s32.totalorder %s114, %s116
      %p120 = scmp.eq.s32.totalorder %s33, 0
      %p121 = por %p119, %p120
      %p122 = scmp.ne.s32.totalorder %s114, %s116
      %p123 = scmp.eq.s32.totalorder %s38, 1
      %p124 = por %p122, %p123
      %p125 = scmp.ne.s32.totalorder %s116, %s117
      %p126 = scmp.eq.s32.totalorder %s38, 0
      %p127 = por %p125, %p126
      %p128 = scmp.ne.s32.totalorder %s116, %s117
      %p129 = scmp.eq.s32.totalorder %s39, 1
      %p130 = por %p128, %p129
      %p132 = scmp.ne.s32.totalorder %s117, %s131
      %p133 = scmp.eq.s32.totalorder %s39, 0
      %p134 = por %p132, %p133
      %s136 = sadd.s32 %s135, 1
      %p139 = scmp.eq.s32.totalorder %s33, 1
      %p140 = scmp.ne.s32.totalorder %s135, %s137
      %p141 = scmp.eq.s32.totalorder %s33, 0
      %p142 = por %p140, %p141
      %p143 = scmp.ne.s32.totalorder %s135, %s137
      %p144 = scmp.eq.s32.totalorder %s38, 1
      %p145 = por %p143, %p144
      %p146 = scmp.ne.s32.totalorder %s137, %s138
      %p147 = scmp.eq.s32.totalorder %s38, 0
      %p148 = por %p146, %p147
      %p149 = scmp.ne.s32.totalorder %s137, %s138
      %p150 = scmp.eq.s32.totalorder %s39, 1
      %p151 = por %p149, %p150
      %p153 = scmp.ne.s32.totalorder %s138, %s152
      %p154 = scmp.eq.s32.totalorder %s39, 0
      %p155 = por %p153, %p154
      %s157 = sadd.s32 %s156, 1
      %p160 = scmp.eq.s32.totalorder %s33, 1
      %p161 = scmp.ne.s32.totalorder %s156, %s158
      %p162 = scmp.eq.s32.totalorder %s33, 0
      %p163 = por %p161, %p162
      %p164 = scmp.ne.s32.totalorder %s156, %s158
      %p165 = scmp.eq.s32.totalorder %s38, 1
      %p166 = por %p164, %p165
      %p167 = scmp.ne.s32.totalorder %s158, %s159
      %p168 = scmp.eq.s32.totalorder %s38, 0
      %p169 = por %p167, %p168
      %p170 = scmp.ne.s32.totalorder %s158, %s159
      %p171 = scmp.eq.s32.totalorder %s39, 1
      %p172 = por %p170, %p171
      %p174 = scmp.ne.s32.totalorder %s159, %s173
      %p175 = scmp.eq.s32.totalorder %s39, 0
      %p176 = por %p174, %p175
      %s178 = sadd.s32 %s177, 1
      %p181 = scmp.eq.s32.totalorder %s33, 1
      %p182 = scmp.ne.s32.totalorder %s177, %s179
      %p183 = scmp.eq.s32.totalorder %s33, 0
      %p184 = por %p182, %p183
      %p185 = scmp.ne.s32.totalorder %s177, %s179
      %p186 = scmp.eq.s32.totalorder %s38, 1
      %p187 = por %p185, %p186
      %p188 = scmp.ne.s32.totalorder %s179, %s180
      %p189 = scmp.eq.s32.totalorder %s38, 0
      %p190 = por %p188, %p189
      %p191 = scmp.ne.s32.totalorder %s179, %s180
      %p192 = scmp.eq.s32.totalorder %s39, 1
      %p193 = por %p191, %p192
      %p195 = scmp.ne.s32.totalorder %s180, %s194
      %p196 = scmp.eq.s32.totalorder %s39, 0
      %p197 = por %p195, %p196
      %s199 = sadd.s32 %s198, 1
      %p202 = scmp.eq.s32.totalorder %s33, 1
      %p203 = scmp.ne.s32.totalorder %s198, %s200
      %p204 = scmp.eq.s32.totalorder %s33, 0
      %p205 = por %p203, %p204
      %p206 = scmp.ne.s32.totalorder %s198, %s200
      %p207 = scmp.eq.s32.totalorder %s38, 1
      %p208 = por %p206, %p207
      %p209 = scmp.ne.s32.totalorder %s200, %s201
      %p210 = scmp.eq.s32.totalorder %s38, 0
      %p211 = por %p209, %p210
      %p212 = scmp.ne.s32.totalorder %s200, %s201
      %p213 = scmp.eq.s32.totalorder %s39, 1
      %p214 = por %p212, %p213
      %p216 = scmp.ne.s32.totalorder %s201, %s215
      %p217 = scmp.eq.s32.totalorder %s39, 0
      %p218 = por %p216, %p217
      %s220 = sadd.s32 %s219, 1
      %p223 = scmp.eq.s32.totalorder %s33, 1
      %p224 = scmp.ne.s32.totalorder %s219, %s221
      %p225 = scmp.eq.s32.totalorder %s33, 0
      %p226 = por %p224, %p225
      %p227 = scmp.ne.s32.totalorder %s219, %s221
      %p228 = scmp.eq.s32.totalorder %s38, 1
      %p229 = por %p227, %p228
      %p230 = scmp.ne.s32.totalorder %s221, %s222
      %p231 = scmp.eq.s32.totalorder %s38, 0
      %p232 = por %p230, %p231
      %p233 = scmp.ne.s32.totalorder %s221, %s222
      %p234 = scmp.eq.s32.totalorder %s39, 1
      %p235 = por %p233, %p234
      %p237 = scmp.ne.s32.totalorder %s222, %s236
      %p238 = scmp.eq.s32.totalorder %s39, 0
      %p239 = por %p237, %p238
      %s241 = sadd.s32 %s240, 1
      %p244 = scmp.eq.s32.totalorder %s33, 1
      %p245 = scmp.ne.s32.totalorder %s240, %s242
      %p246 = scmp.eq.s32.totalorder %s33, 0
      %p247 = por %p245, %p246
      %p248 = scmp.ne.s32.totalorder %s240, %s242
      %p249 = scmp.eq.s32.totalorder %s38, 1
      %p250 = por %p248, %p249
      %p251 = scmp.ne.s32.totalorder %s242, %s243
      %p252 = scmp.eq.s32.totalorder %s38, 0
      %p253 = por %p251, %p252
      %p254 = scmp.ne.s32.totalorder %s242, %s243
      %p255 = scmp.eq.s32.totalorder %s39, 1
      %p256 = por %p254, %p255
      %p258 = scmp.ne.s32.totalorder %s243, %s257
      %p259 = scmp.eq.s32.totalorder %s39, 0
      %p260 = por %p258, %p259
      %s262 = sadd.s32 %s261, 1
      %p265 = scmp.eq.s32.totalorder %s33, 1
      %p266 = scmp.ne.s32.totalorder %s261, %s263
      %p267 = scmp.eq.s32.totalorder %s33, 0
      %p268 = por %p266, %p267
      %p269 = scmp.ne.s32.totalorder %s261, %s263
      %p270 = scmp.eq.s32.totalorder %s38, 1
      %p271 = por %p269, %p270
      %p272 = scmp.ne.s32.totalorder %s263, %s264
      %p273 = scmp.eq.s32.totalorder %s38, 0
      %p274 = por %p272, %p273
      %p275 = scmp.ne.s32.totalorder %s263, %s264
      %p276 = scmp.eq.s32.totalorder %s39, 1
      %p277 = por %p275, %p276
      %p279 = scmp.ne.s32.totalorder %s264, %s278
      %p280 = scmp.eq.s32.totalorder %s39, 0
      %p281 = por %p279, %p280
      %s283 = sadd.s32 %s282, 1
      %p286 = scmp.eq.s32.totalorder %s33, 1
      %p287 = scmp.ne.s32.totalorder %s282, %s284
      %p288 = scmp.eq.s32.totalorder %s33, 0
      %p289 = por %p287, %p288
      %p290 = scmp.ne.s32.totalorder %s282, %s284
      %p291 = scmp.eq.s32.totalorder %s38, 1
      %p292 = por %p290, %p291
      %p293 = scmp.ne.s32.totalorder %s284, %s285
      %p294 = scmp.eq.s32.totalorder %s38, 0
      %p295 = por %p293, %p294
      %p296 = scmp.ne.s32.totalorder %s284, %s285
      %p297 = scmp.eq.s32.totalorder %s39, 1
      %p298 = por %p296, %p297
      %p300 = scmp.ne.s32.totalorder %s285, %s299
      %p301 = scmp.eq.s32.totalorder %s39, 0
      %p302 = por %p300, %p301
      %s303 = ssub.s32 %s33, %s40
      %p304 = scmp.eq.s32.totalorder %s303, 0
      %s306 = sadd.s32 %s305, 1
      %s307 = scalar_select %p304, %s305, %s306
      %p310 = pneg %p304
      %p311 = scmp.eq.s32.totalorder %s33, 1
      %p312 = por %p310, %p311
      %p313 = scmp.ne.s32.totalorder %s305, %s308
      %p314 = scmp.eq.s32.totalorder %s33, 0
      %p315 = por %p313, %p314
      %p316 = scmp.ne.s32.totalorder %s305, %s308
      %p317 = scmp.eq.s32.totalorder %s38, 1
      %p318 = por %p316, %p317
      %p319 = scmp.ne.s32.totalorder %s308, %s309
      %p320 = scmp.eq.s32.totalorder %s38, 0
      %p321 = por %p319, %p320
      %p322 = scmp.ne.s32.totalorder %s308, %s309
      %p323 = scmp.eq.s32.totalorder %s39, 1
      %p324 = por %p322, %p323
      %p326 = scmp.ne.s32.totalorder %s309, %s325
      %p327 = scmp.eq.s32.totalorder %s39, 0
      %p328 = por %p326, %p327
      %s329 = ssub.s32 %s33, %s40
      %p330 = scmp.eq.s32.totalorder %s329, 0
      %s332 = sadd.s32 %s331, 1
      %s333 = scalar_select %p330, %s331, %s332
      %p336 = pneg %p330
      %p337 = scmp.eq.s32.totalorder %s33, 1
      %p338 = por %p336, %p337
      %p339 = scmp.ne.s32.totalorder %s331, %s334
      %p340 = scmp.eq.s32.totalorder %s33, 0
      %p341 = por %p339, %p340
      %p342 = scmp.ne.s32.totalorder %s331, %s334
      %p343 = scmp.eq.s32.totalorder %s38, 1
      %p344 = por %p342, %p343
      %p345 = scmp.ne.s32.totalorder %s334, %s335
      %p346 = scmp.eq.s32.totalorder %s38, 0
      %p347 = por %p345, %p346
      %p348 = scmp.ne.s32.totalorder %s334, %s335
      %p349 = scmp.eq.s32.totalorder %s39, 1
      %p350 = por %p348, %p349
      %p352 = scmp.ne.s32.totalorder %s335, %s351
      %p353 = scmp.eq.s32.totalorder %s39, 0
      %p354 = por %p352, %p353
      %p355 = scmp.le.s32.totalorder 1, %s33
      %p356 = scmp.lt.s32.totalorder %s33, 3
      %p357 = pnand %p355, %p356
      %p358 = pneg %p357
      // Predicated region
      $region9: #{tpu_custom_call.1} parent=5 // pred_check
        _
      $region10: #{tpu_custom_call.1} parent=5 // pred_check_branch
        %360 = sbr.rel (%p357) target = $region12
      $region11: #{tpu_custom_call.1} parent=5 // pred_region
        %s361 = ssub.s32 %s33, 1
        // Predicated region
        $region13: #{tpu_custom_call.1} parent=11 // pred_check
          %p362 = pneg %p106
        $region14: #{tpu_custom_call.1} parent=11 // pred_check_branch
          %364 = sbr.rel (%p362) target = $region16
        $region15: #{tpu_custom_call.1} parent=11 // pred_region
          %s366 = ssub.s32 256, 256
          %367 = vsyncadd [#allocation6], %s366
          %s368 = sshll.u32 [#allocation7], 4
          %s369 = int_to_ptr.vmem [resolvable:$true] %s368
          %374 = dma.hbm_to_vmem [thread:$0]  %s2, 256, %s369, [#allocation6], 64, 64, 4
        $region16: #{tpu_custom_call.1} parent=11 // pred_fallthru
          _
        // Predicated region
        $region17: #{tpu_custom_call.1} parent=11 // pred_check
          %p375 = pneg %p127
        $region18: #{tpu_custom_call.1} parent=11 // pred_check_branch
          %377 = sbr.rel (%p375) target = $region20
        $region19: #{tpu_custom_call.1} parent=11 // pred_region
          _
        $region20: #{tpu_custom_call.1} parent=11 // pred_fallthru
          _
        // Predicated region
        $region21: #{tpu_custom_call.1} parent=11 // pred_check
          %p378 = pneg %p148
        $region22: #{tpu_custom_call.1} parent=11 // pred_check_branch
          %380 = sbr.rel (%p378) target = $region24
        $region23: #{tpu_custom_call.1} parent=11 // pred_region
          %s382 = ssub.s32 256, 256
          %383 = vsyncadd [#allocation9], %s382
          %s384 = sshll.u32 [#allocation8], 4
          %s385 = int_to_ptr.vmem [resolvable:$true] %s384
          %390 = dma.hbm_to_vmem [thread:$0]  %s4, 256, %s385, [#allocation9], 64, 64, 4
        $region24: #{tpu_custom_call.1} parent=11 // pred_fallthru
          _
        // Predicated region
        $region25: #{tpu_custom_call.1} parent=11 // pred_check
          %p391 = pneg %p169
        $region26: #{tpu_custom_call.1} parent=11 // pred_check_branch
          %393 = sbr.rel (%p391) target = $region28
        $region27: #{tpu_custom_call.1} parent=11 // pred_region
          _
        $region28: #{tpu_custom_call.1} parent=11 // pred_fallthru
          _
        // Predicated region
        $region29: #{tpu_custom_call.1} parent=11 // pred_check
          %p394 = pneg %p190
        $region30: #{tpu_custom_call.1} parent=11 // pred_check_branch
          %396 = sbr.rel (%p394) target = $region32
        $region31: #{tpu_custom_call.1} parent=11 // pred_region
          _
        $region32: #{tpu_custom_call.1} parent=11 // pred_fallthru
          _
        // Predicated region
        $region33: #{tpu_custom_call.1} parent=11 // pred_check
          %p397 = pneg %p211
        $region34: #{tpu_custom_call.1} parent=11 // pred_check_branch
          %399 = sbr.rel (%p397) target = $region36
        $region35: #{tpu_custom_call.1} parent=11 // pred_region
          _
        $region36: #{tpu_custom_call.1} parent=11 // pred_fallthru
          _
        // Predicated region
        $region37: #{tpu_custom_call.1} parent=11 // pred_check
          %p400 = pneg %p232
        $region38: #{tpu_custom_call.1} parent=11 // pred_check_branch
          %402 = sbr.rel (%p400) target = $region40
        $region39: #{tpu_custom_call.1} parent=11 // pred_region
          %s404 = ssub.s32 128, 128
          %405 = vsyncadd [#allocation9], %s404
          %s406 = sshll.u32 [#allocation10], 4
          %s407 = int_to_ptr.vmem [resolvable:$true] %s406
          %412 = dma.hbm_to_vmem [thread:$0]  %s8, 128, %s407, [#allocation9], 64, 64, 4
        $region40: #{tpu_custom_call.1} parent=11 // pred_fallthru
          _
        // Predicated region
        $region41: #{tpu_custom_call.1} parent=11 // pred_check
          %p413 = pneg %p253
        $region42: #{tpu_custom_call.1} parent=11 // pred_check_branch
          %415 = sbr.rel (%p413) target = $region44
        $region43: #{tpu_custom_call.1} parent=11 // pred_region
          _
        $region44: #{tpu_custom_call.1} parent=11 // pred_fallthru
          _
        // Predicated region
        $region45: #{tpu_custom_call.1} parent=11 // pred_check
          %p416 = pneg %p274
        $region46: #{tpu_custom_call.1} parent=11 // pred_check_branch
          %418 = sbr.rel (%p416) target = $region48
        $region47: #{tpu_custom_call.1} parent=11 // pred_region
          _
        $region48: #{tpu_custom_call.1} parent=11 // pred_fallthru
          _
        // Predicated region
        $region49: #{tpu_custom_call.1} parent=11 // pred_check
          %p419 = pneg %p295
        $region50: #{tpu_custom_call.1} parent=11 // pred_check_branch
          %421 = sbr.rel (%p419) target = $region52
        $region51: #{tpu_custom_call.1} parent=11 // pred_region
          _
        $region52: #{tpu_custom_call.1} parent=11 // pred_fallthru
          _
      $region12: #{tpu_custom_call.1} parent=5 // pred_fallthru
        _
      %p422 = scmp.lt.s32.totalorder %s33, 2
      // Predicated region
      $region53: #{tpu_custom_call.1} parent=5 // pred_check
        %p423 = pneg %p422
      $region54: #{tpu_custom_call.1} parent=5 // pred_check_branch
        %425 = sbr.rel (%p423) target = $region56
      $region55: #{tpu_custom_call.1} parent=5 // pred_region
        // Predicated region
        $region57: #{tpu_custom_call.1} parent=55 // pred_check
          %p426 = pneg %p53
        $region58: #{tpu_custom_call.1} parent=55 // pred_check_branch
          %428 = sbr.rel (%p426) target = $region60
        $region59: #{tpu_custom_call.1} parent=55 // pred_region
          %s429 = sand.u32 %s43, 1
          %s430 = scalar_lea.sflag [#allocation3], %s429
          %s431 = sand.u32 %s43, 1
          %s432 = smul.addr %s431, 8
          %s433 = scalar_lea.vmem [#allocation2], %s432
          %s435 = ssub.s32 128, 128
          %436 = vsyncadd %s430, %s435
          %s437 = smul.addr %s33, 128
          %s438 = scalar_lea.hbm %s0, %s437
          %s440 = sshll.u32 %s433, 4
          %s441 = int_to_ptr.vmem [resolvable:$true] %s440
          %443 = dma.hbm_to_vmem [thread:$0]  %s438, 128, %s441, %s430
        $region60: #{tpu_custom_call.1} parent=55 // pred_fallthru
          _
        // Predicated region
        $region61: #{tpu_custom_call.1} parent=55 // pred_check
          %p444 = pneg %p79
        $region62: #{tpu_custom_call.1} parent=55 // pred_check_branch
          %446 = sbr.rel (%p444) target = $region64
        $region63: #{tpu_custom_call.1} parent=55 // pred_region
          %s447 = sand.u32 %s33, 1
          %s448 = scalar_lea.sflag [#allocation6], %s447
          %s449 = sand.u32 %s69, 1
          %s450 = smul.addr %s449, 8
          %s451 = scalar_lea.vmem [#allocation5], %s450
          %s453 = ssub.s32 128, 128
          %454 = vsyncadd %s448, %s453
          %s455 = smul.addr %s33, 128
          %s456 = scalar_lea.hbm %s1, %s455
          %s458 = sshll.u32 %s451, 4
          %s459 = int_to_ptr.vmem [resolvable:$true] %s458
          %461 = dma.hbm_to_vmem [thread:$0]  %s456, 128, %s459, %s448
        $region64: #{tpu_custom_call.1} parent=55 // pred_fallthru
          _
      $region56: #{tpu_custom_call.1} parent=5 // pred_fallthru
        _
      %p462 = scmp.le.s32.totalorder 1, %s33
      %p463 = scmp.lt.s32.totalorder %s33, 3
      %p464 = pnand %p462, %p463
      %p465 = pneg %p464
      // Predicated region
      $region65: #{tpu_custom_call.1} parent=5 // pred_check
        _
      $region66: #{tpu_custom_call.1} parent=5 // pred_check_branch
        %467 = sbr.rel (%p464) target = $region68
      $region67: #{tpu_custom_call.1} parent=5 // pred_region
        %s468 = ssub.s32 %s33, 1
        %s469 = sand.u32 %s46, 1
        %s470 = scalar_lea.sflag [#allocation3], %s469
        %s471 = sand.u32 %s46, 1
        %s472 = smul.addr %s471, 8
        %s473 = scalar_lea.vmem [#allocation2], %s472
        // Predicated region
        $region69: #{tpu_custom_call.1} parent=67 // pred_check
          %p474 = pneg %p59
        $region70: #{tpu_custom_call.1} parent=67 // pred_check_branch
          %476 = sbr.rel (%p474) target = $region72
        $region71: #{tpu_custom_call.1} parent=67 // pred_region
          %477 = dma.done %s470, 128
        $region72: #{tpu_custom_call.1} parent=67 // pred_fallthru
          _
        %s478 = sand.u32 %s38, 1
        %s479 = scalar_lea.sflag [#allocation6], %s478
        %s480 = sand.u32 %s72, 1
        %s481 = smul.addr %s480, 8
        %s482 = scalar_lea.vmem [#allocation5], %s481
        // Predicated region
        $region73: #{tpu_custom_call.1} parent=67 // pred_check
          %p483 = pneg %p85
        $region74: #{tpu_custom_call.1} parent=67 // pred_check_branch
          %485 = sbr.rel (%p483) target = $region76
        $region75: #{tpu_custom_call.1} parent=67 // pred_region
          %486 = dma.done %s479, 128
        $region76: #{tpu_custom_call.1} parent=67 // pred_fallthru
          _
        // Predicated region
        $region77: #{tpu_custom_call.1} parent=67 // pred_check
          %p487 = pneg %p106
        $region78: #{tpu_custom_call.1} parent=67 // pred_check_branch
          %489 = sbr.rel (%p487) target = $region80
        $region79: #{tpu_custom_call.1} parent=67 // pred_region
          %490 = dma.done [#allocation6], 256
        $region80: #{tpu_custom_call.1} parent=67 // pred_fallthru
          _
        // Predicated region
        $region81: #{tpu_custom_call.1} parent=67 // pred_check
          %p491 = pneg %p148
        $region82: #{tpu_custom_call.1} parent=67 // pred_check_branch
          %493 = sbr.rel (%p491) target = $region84
        $region83: #{tpu_custom_call.1} parent=67 // pred_region
          %494 = dma.done [#allocation9], 256
        $region84: #{tpu_custom_call.1} parent=67 // pred_fallthru
          _
        // Predicated region
        $region85: #{tpu_custom_call.1} parent=67 // pred_check
          %p495 = pneg %p232
        $region86: #{tpu_custom_call.1} parent=67 // pred_check_branch
          %497 = sbr.rel (%p495) target = $region88
        $region87: #{tpu_custom_call.1} parent=67 // pred_region
          %498 = dma.done [#allocation9], 128
        $region88: #{tpu_custom_call.1} parent=67 // pred_fallthru
          _
        %s499 = sand.u32 %s46, 1
        %s500 = scalar_lea.sflag [#allocation3], %s499
        %s501 = sand.u32 %s46, 1
        %s502 = smul.addr %s501, 8
        %s503 = scalar_lea.vmem [#allocation2], %s502
        %p504 = pneg %p59
        %p505 = pneg %p56
        %s506 = sand.u32 %s38, 1
        %s507 = scalar_lea.sflag [#allocation6], %s506
        %s508 = sand.u32 %s72, 1
        %s509 = smul.addr %s508, 8
        %s510 = scalar_lea.vmem [#allocation5], %s509
        %p511 = pneg %p85
        %p512 = pneg %p82
        %p513 = pneg %p106
        %p514 = pneg %p103
        %p515 = pneg %p127
        %p516 = pneg %p124
        %p517 = pneg %p148
        %p518 = pneg %p145
        %p519 = pneg %p169
        %p520 = pneg %p166
        %p521 = pneg %p190
        %p522 = pneg %p187
        %p523 = pneg %p211
        %p524 = pneg %p208
        %p525 = pneg %p232
        %p526 = pneg %p229
        %p527 = pneg %p253
        %p528 = pneg %p250
        %p529 = pneg %p274
        %p530 = pneg %p271
        %p531 = pneg %p295
        %p532 = pneg %p292
        %p533 = pneg %p321
        %p534 = pneg %p318
        %s535 = sand.u32 %s308, 1
        %s536 = scalar_lea.sflag [#allocation4], %s535
        %s537 = sand.u32 %s308, 1
        %s538 = smul.addr %s537, 8
        %s539 = scalar_lea.vmem [#allocation11], %s538
        %p540 = pneg %p347
        %p541 = pneg %p344
        %s542 = sand.u32 %s334, 1
        %s543 = scalar_lea.sflag [#allocation13], %s542
        %s544 = sand.u32 %s334, 1
        %s545 = smul.addr %s544, 8
        %s546 = scalar_lea.vmem [#allocation12], %s545
        %v548 = vld [vmem:[%s473] sm:$0xff]
        %v549 = vld [vmem:[%s482] sm:$0xff]
        %v550 = vpack.c.bf16 %v548, %v548
        %v551 = vld [vmem:[#allocation7] sm:$0xf]
        %v552 = vld [vmem:[#allocation7 + $0x4] sm:$0xf]
        %v553 = vld [vmem:[#allocation7 + $0x8] sm:$0xf]
        %v554 = vld [vmem:[#allocation7 + $0xc] sm:$0xf]
        %v555 = vld [vmem:[%s3] sm:$0x1]
        %v557 = vlaneseq
        %v558 = vshrl.u32 %v557, 7
        %v559 = vsub.s32 0, %v558
        %v560 = vrot.slane %v555, %v559
        %v566 = vunpack.c.l.b16 %v551
        %v567 = vunpack.c.l.b16 %v552
        %v568 = vunpack.c.l.b16 %v553
        %v569 = vunpack.c.l.b16 %v554
        %v570 = vpack.c.b16 %v567, %v566
        %v571 = vpack.c.b16 %v569, %v568
        %vm574 = vcmask 261120
        %v576 = vsel %vm574, %v550, 0
        %578 = vmatprep.subr.bf16.mxu0 0
        %579 = vmatpush1.bf16.msra.mxu0 %v570
        %580 = vmatprep.subr.bf16.mxu0 0
        %581 = vmatpush1.bf16.msra.mxu0 %v571
        %582 = vmatprep.subr.bf16.mxu0 0
        %583 = vmatpush1.bf16.msra.mxu0 0
        %584 = vmatprep.subr.bf16.mxu0 0
        %585 = vmatpush1.bf16.msra.mxu0 0
        %586 = vmatprep.subr.bf16.mxu0 0
        %587 = vmatpush1.bf16.msra.mxu0 0
        %588 = vmatprep.subr.bf16.mxu0 0
        %589 = vmatpush1.bf16.msra.mxu0 0
        %590 = vmatprep.subr.bf16.mxu0 0
        %591 = vmatpush1.bf16.msra.mxu0 0
        %592 = vmatprep.subr.bf16.mxu0 0
        %593 = vmatpush1.bf16.msra.mxu0 0
        %594 = vmatprep.subr.bf16.mxu0 0
        %595 = vmatpush1.bf16.msra.mxu0 0
        %596 = vmatprep.subr.bf16.mxu0 0
        %597 = vmatpush1.bf16.msra.mxu0 0
        %598 = vmatprep.subr.bf16.mxu0 0
        %599 = vmatpush1.bf16.msra.mxu0 0
        %600 = vmatprep.subr.bf16.mxu0 0
        %601 = vmatpush1.bf16.msra.mxu0 0
        %602 = vmatprep.subr.bf16.mxu0 0
        %603 = vmatpush1.bf16.msra.mxu0 0
        %604 = vmatprep.subr.bf16.mxu0 0
        %605 = vmatpush1.bf16.msra.mxu0 0
        %606 = vmatprep.subr.bf16.mxu0 0
        %607 = vmatpush1.bf16.msra.mxu0 0
        %608 = vmatprep.subr.bf16.mxu0 0
        %609 = vmatpush1.bf16.msra.mxu0 0
        %610 = vmatprep.mubr.bf16.mxu0 0
        %611 = vmatmul.mubr.bf16.gmra.mrb[0].mxu0 %v576
        %v612 = vpop.f32.mrb[0].mxu0
        %v613 = vadd.f32 %v560, %v612
        %v614 = vpop.f32.mrb[0].mxu0
        %v615 = vpop.f32.mrb[0].mxu0
        %v616 = vpop.f32.mrb[0].mxu0
        %617 = vdwg.mxu0
        %v618 = vtanh.pop %v613
        %v619 = vpack.c.bf16 %v618, %v618
        %v620 = vld [vmem:[#allocation8] sm:$0xf]
        %v621 = vld [vmem:[#allocation8 + $0x4] sm:$0xf]
        %v622 = vld [vmem:[#allocation8 + $0x8] sm:$0xf]
        %v623 = vld [vmem:[#allocation8 + $0xc] sm:$0xf]
        %v624 = vld [vmem:[%s5] sm:$0x1]
        %v626 = vlaneseq
        %v627 = vshrl.u32 %v626, 7
        %v628 = vsub.s32 0, %v627
        %v629 = vrot.slane %v624, %v628
        %v635 = vunpack.c.l.b16 %v620
        %v636 = vunpack.c.l.b16 %v621
        %v637 = vunpack.c.l.b16 %v622
        %v638 = vunpack.c.l.b16 %v623
        %v639 = vpack.c.b16 %v636, %v635
        %v640 = vpack.c.b16 %v638, %v637
        %v644 = vsel %vm574, %v619, 0
        %646 = vmatprep.subr.bf16.mxu0 0
        %647 = vmatpush1.bf16.msra.mxu0 %v639
        %648 = vmatprep.subr.bf16.mxu0 0
        %649 = vmatpush1.bf16.msra.mxu0 %v640
        %650 = vmatprep.subr.bf16.mxu0 0
        %651 = vmatpush1.bf16.msra.mxu0 0
        %652 = vmatprep.subr.bf16.mxu0 0
        %653 = vmatpush1.bf16.msra.mxu0 0
        %654 = vmatprep.subr.bf16.mxu0 0
        %655 = vmatpush1.bf16.msra.mxu0 0
        %656 = vmatprep.subr.bf16.mxu0 0
        %657 = vmatpush1.bf16.msra.mxu0 0
        %658 = vmatprep.subr.bf16.mxu0 0
        %659 = vmatpush1.bf16.msra.mxu0 0
        %660 = vmatprep.subr.bf16.mxu0 0
        %661 = vmatpush1.bf16.msra.mxu0 0
        %662 = vmatprep.subr.bf16.mxu0 0
        %663 = vmatpush1.bf16.msra.mxu0 0
        %664 = vmatprep.subr.bf16.mxu0 0
        %665 = vmatpush1.bf16.msra.mxu0 0
        %666 = vmatprep.subr.bf16.mxu0 0
        %667 = vmatpush1.bf16.msra.mxu0 0
        %668 = vmatprep.subr.bf16.mxu0 0
        %669 = vmatpush1.bf16.msra.mxu0 0
        %670 = vmatprep.subr.bf16.mxu0 0
        %671 = vmatpush1.bf16.msra.mxu0 0
        %672 = vmatprep.subr.bf16.mxu0 0
        %673 = vmatpush1.bf16.msra.mxu0 0
        %674 = vmatprep.subr.bf16.mxu0 0
        %675 = vmatpush1.bf16.msra.mxu0 0
        %676 = vmatprep.subr.bf16.mxu0 0
        %677 = vmatpush1.bf16.msra.mxu0 0
        %678 = vmatprep.mubr.bf16.mxu0 0
        %679 = vmatmul.mubr.bf16.gmra.mrb[0].mxu0 %v644
        %v680 = vpop.f32.mrb[0].mxu0
        %v681 = vadd.f32 %v629, %v680
        %v682 = vpop.f32.mrb[0].mxu0
        %v683 = vpop.f32.mrb[0].mxu0
        %v684 = vpop.f32.mrb[0].mxu0
        %685 = vdwg.mxu0
        %v686 = vmul.f32 %v681, 0.5
        %v687 = vmul.f32 %v686, 1.442695
        %v688 = vpow.pop %v687
        %690 = vrot.lane.b32.xlu0 %v549, 16
        %v691 = vpop.permute.xlu0 %690
        %v693 = vmul.f32 %v688, %v691
        %695 = vrot.lane.b32.xlu0 %v693, 112
        %v696 = vpop.permute.xlu0 %695
        %v698 = vadd.f32 %v681, %v696
        %v699 = vpack.c.bf16 %v698, %v698
        %v700 = vld [vmem:[%s6] sm:$0xf]
        %v701 = vld [vmem:[%s6 + $0x4] sm:$0xf]
        %v702 = vld [vmem:[%s7] sm:$0x1]
        %v704 = vlaneseq
        %v705 = vshrl.u32 %v704, 7
        %v706 = vsub.s32 0, %v705
        %v707 = vrot.slane %v702, %v706
        %v711 = vunpack.c.l.b16 %v700
        %v712 = vunpack.c.l.b16 %v701
        %v713 = vpack.c.b16 %v712, %v711
        %vm715 = vcmask 130048
        %v717 = vsel %vm715, %v699, 0
        %719 = vmatprep.subr.bf16.mxu0 0
        %720 = vmatpush1.bf16.msra.mxu0 %v713
        %721 = vmatprep.subr.bf16.mxu0 0
        %722 = vmatpush1.bf16.msra.mxu0 0
        %723 = vmatprep.subr.bf16.mxu0 0
        %724 = vmatpush1.bf16.msra.mxu0 0
        %725 = vmatprep.subr.bf16.mxu0 0
        %726 = vmatpush1.bf16.msra.mxu0 0
        %727 = vmatprep.subr.bf16.mxu0 0
        %728 = vmatpush1.bf16.msra.mxu0 0
        %729 = vmatprep.subr.bf16.mxu0 0
        %730 = vmatpush1.bf16.msra.mxu0 0
        %731 = vmatprep.subr.bf16.mxu0 0
        %732 = vmatpush1.bf16.msra.mxu0 0
        %733 = vmatprep.subr.bf16.mxu0 0
        %734 = vmatpush1.bf16.msra.mxu0 0
        %735 = vmatprep.subr.bf16.mxu0 0
        %736 = vmatpush1.bf16.msra.mxu0 0
        %737 = vmatprep.subr.bf16.mxu0 0
        %738 = vmatpush1.bf16.msra.mxu0 0
        %739 = vmatprep.subr.bf16.mxu0 0
        %740 = vmatpush1.bf16.msra.mxu0 0
        %741 = vmatprep.subr.bf16.mxu0 0
        %742 = vmatpush1.bf16.msra.mxu0 0
        %743 = vmatprep.subr.bf16.mxu0 0
        %744 = vmatpush1.bf16.msra.mxu0 0
        %745 = vmatprep.subr.bf16.mxu0 0
        %746 = vmatpush1.bf16.msra.mxu0 0
        %747 = vmatprep.subr.bf16.mxu0 0
        %748 = vmatpush1.bf16.msra.mxu0 0
        %749 = vmatprep.subr.bf16.mxu0 0
        %750 = vmatpush1.bf16.msra.mxu0 0
        %751 = vmatprep.mubr.bf16.mxu0 0
        %752 = vmatmul.mubr.bf16.gmra.mrb[0].mxu0 %v717
        %v753 = vpop.f32.mrb[0].mxu0
        %v754 = vadd.f32 %v707, %v753
        %v755 = vpop.f32.mrb[0].mxu0
        %v756 = vpop.f32.mrb[0].mxu0
        %v757 = vpop.f32.mrb[0].mxu0
        %758 = vdwg.mxu0
        %v759 = vlaneseq
        %v760 = vand.u32 %v759, 127
        %vm761 = vcmp.lt.s32.totalorder %v760, 8
        %v762 = vtanh.pop %v754
        %v763 = vmul.f32 %v762, 1.442695
        %v764 = vpow.pop %v763
        %v765 = vmul.f32 %v698, %v764
        %767 = vrot.lane.b32.xlu0 %v754, 112
        %v768 = vpop.permute.xlu0 %767
        %v770 = vadd.f32 %v765, %v768
        %v771 = vsel %vm761, %v698, %v770
        %772 = vst.msk [vmem:[%s539] sm:$0xff] %vm574, %v681
        %774 = vrot.lane.b32.xlu0 %v698, 32
        %v775 = vpop.permute.xlu0 %774
        %vm777 = vcmask 392448
        %778 = vst.msk [vmem:[%s539] sm:$0xff] %vm777, %v775
        %780 = vrot.lane.b32.xlu0 %v771, 48
        %v781 = vpop.permute.xlu0 %780
        %vm783 = vcmask 523648
        %784 = vst.msk [vmem:[%s539] sm:$0xff] %vm783, %v781
        %v785 = vld [vmem:[#allocation10] sm:$0xf]
        %v786 = vld [vmem:[#allocation10 + $0x4] sm:$0xf]
        %v787 = vld [vmem:[%s9] sm:$0x1]
        %v789 = vlaneseq
        %v790 = vshrl.u32 %v789, 7
        %v791 = vsub.s32 0, %v790
        %v792 = vrot.slane %v787, %v791
        %v796 = vunpack.c.l.b16 %v785
        %v797 = vunpack.c.l.b16 %v786
        %v798 = vpack.c.b16 %v797, %v796
        %800 = vmatprep.subr.bf16.mxu0 0
        %801 = vmatpush1.bf16.msra.mxu0 %v798
        %802 = vmatprep.subr.bf16.mxu0 0
        %803 = vmatpush1.bf16.msra.mxu0 0
        %804 = vmatprep.subr.bf16.mxu0 0
        %805 = vmatpush1.bf16.msra.mxu0 0
        %806 = vmatprep.subr.bf16.mxu0 0
        %807 = vmatpush1.bf16.msra.mxu0 0
        %808 = vmatprep.subr.bf16.mxu0 0
        %809 = vmatpush1.bf16.msra.mxu0 0
        %810 = vmatprep.subr.bf16.mxu0 0
        %811 = vmatpush1.bf16.msra.mxu0 0
        %812 = vmatprep.subr.bf16.mxu0 0
        %813 = vmatpush1.bf16.msra.mxu0 0
        %814 = vmatprep.subr.bf16.mxu0 0
        %815 = vmatpush1.bf16.msra.mxu0 0
        %816 = vmatprep.subr.bf16.mxu0 0
        %817 = vmatpush1.bf16.msra.mxu0 0
        %818 = vmatprep.subr.bf16.mxu0 0
        %819 = vmatpush1.bf16.msra.mxu0 0
        %820 = vmatprep.subr.bf16.mxu0 0
        %821 = vmatpush1.bf16.msra.mxu0 0
        %822 = vmatprep.subr.bf16.mxu0 0
        %823 = vmatpush1.bf16.msra.mxu0 0
        %824 = vmatprep.subr.bf16.mxu0 0
        %825 = vmatpush1.bf16.msra.mxu0 0
        %826 = vmatprep.subr.bf16.mxu0 0
        %827 = vmatpush1.bf16.msra.mxu0 0
        %828 = vmatprep.subr.bf16.mxu0 0
        %829 = vmatpush1.bf16.msra.mxu0 0
        %830 = vmatprep.subr.bf16.mxu0 0
        %831 = vmatpush1.bf16.msra.mxu0 0
        %832 = vmatprep.mubr.bf16.mxu0 0
        %833 = vmatmul.mubr.bf16.gmra.mrb[0].mxu0 %v717
        %v834 = vpop.f32.mrb[0].mxu0
        %v835 = vadd.f32 %v792, %v834
        %v836 = vpop.f32.mrb[0].mxu0
        %v837 = vpop.f32.mrb[0].mxu0
        %v838 = vpop.f32.mrb[0].mxu0
        %839 = vdwg.mxu0
        %v840 = vtanh.pop %v835
        %v841 = vpack.c.bf16 %v840, %v840
        %v842 = vld [vmem:[%s10] sm:$0xf]
        %v843 = vld [vmem:[%s10 + $0x4] sm:$0xf]
        %v844 = vld [vmem:[%s10 + $0x8] sm:$0xf]
        %v845 = vld [vmem:[%s10 + $0xc] sm:$0xf]
        %v846 = vld [vmem:[%s11] sm:$0x1]
        %v848 = vlaneseq
        %v849 = vshrl.u32 %v848, 7
        %v850 = vsub.s32 0, %v849
        %v851 = vrot.slane %v846, %v850
        %v857 = vunpack.c.l.b16 %v842
        %v858 = vunpack.c.l.b16 %v843
        %v859 = vunpack.c.l.b16 %v844
        %v860 = vunpack.c.l.b16 %v845
        %v861 = vpack.c.b16 %v858, %v857
        %v862 = vpack.c.b16 %v860, %v859
        %v866 = vsel %vm574, %v841, 0
        %868 = vmatprep.subr.bf16.mxu0 0
        %869 = vmatpush1.bf16.msra.mxu0 %v861
        %870 = vmatprep.subr.bf16.mxu0 0
        %871 = vmatpush1.bf16.msra.mxu0 %v862
        %872 = vmatprep.subr.bf16.mxu0 0
        %873 = vmatpush1.bf16.msra.mxu0 0
        %874 = vmatprep.subr.bf16.mxu0 0
        %875 = vmatpush1.bf16.msra.mxu0 0
        %876 = vmatprep.subr.bf16.mxu0 0
        %877 = vmatpush1.bf16.msra.mxu0 0
        %878 = vmatprep.subr.bf16.mxu0 0
        %879 = vmatpush1.bf16.msra.mxu0 0
        %880 = vmatprep.subr.bf16.mxu0 0
        %881 = vmatpush1.bf16.msra.mxu0 0
        %882 = vmatprep.subr.bf16.mxu0 0
        %883 = vmatpush1.bf16.msra.mxu0 0
        %884 = vmatprep.subr.bf16.mxu0 0
        %885 = vmatpush1.bf16.msra.mxu0 0
        %886 = vmatprep.subr.bf16.mxu0 0
        %887 = vmatpush1.bf16.msra.mxu0 0
        %888 = vmatprep.subr.bf16.mxu0 0
        %889 = vmatpush1.bf16.msra.mxu0 0
        %890 = vmatprep.subr.bf16.mxu0 0
        %891 = vmatpush1.bf16.msra.mxu0 0
        %892 = vmatprep.subr.bf16.mxu0 0
        %893 = vmatpush1.bf16.msra.mxu0 0
        %894 = vmatprep.subr.bf16.mxu0 0
        %895 = vmatpush1.bf16.msra.mxu0 0
        %896 = vmatprep.subr.bf16.mxu0 0
        %897 = vmatpush1.bf16.msra.mxu0 0
        %898 = vmatprep.subr.bf16.mxu0 0
        %899 = vmatpush1.bf16.msra.mxu0 0
        %900 = vmatprep.mubr.bf16.mxu0 0
        %901 = vmatmul.mubr.bf16.gmra.mrb[0].mxu0 %v866
        %v902 = vpop.f32.mrb[0].mxu0
        %v903 = vadd.f32 %v851, %v902
        %v904 = vpop.f32.mrb[0].mxu0
        %v905 = vpop.f32.mrb[0].mxu0
        %v906 = vpop.f32.mrb[0].mxu0
        %907 = vdwg.mxu0
        %v908 = vsel %vm574, %v903, -inf
        %909 = vmax.xlane.f32.xlu0 %v908
        %v910 = vpop.xlane.xlu0 %909
        %v911 = vsub.f32 %v903, %v910
        %v912 = vmul.f32 %v911, 1.442695
        %v913 = vpow.pop %v912
        %v914 = vsel %vm574, %v913, 0.0
        %915 = vadd.xlane.f32.xlu0 %v914
        %v916 = vpop.xlane.xlu0 %915
        %v917 = vrcp.pop %v916
        %v918 = vmul.f32 %v913, %v917
        %919 = vst.msk [vmem:[%s546] sm:$0xff] %vm574, %v918
        %s920 = sand.u32 %s308, 1
        %s921 = scalar_lea.sflag [#allocation4], %s920
        %s922 = sand.u32 %s308, 1
        %s923 = smul.addr %s922, 8
        %s924 = scalar_lea.vmem [#allocation11], %s923
        %s925 = sand.u32 %s334, 1
        %s926 = scalar_lea.sflag [#allocation13], %s925
        %s927 = sand.u32 %s334, 1
        %s928 = smul.addr %s927, 8
        %s929 = scalar_lea.vmem [#allocation12], %s928
        // Predicated region
        $region89: #{tpu_custom_call.1} parent=67 // pred_check
          %p930 = pneg %p318
        $region90: #{tpu_custom_call.1} parent=67 // pred_check_branch
          %932 = sbr.rel (%p930) target = $region92
        $region91: #{tpu_custom_call.1} parent=67 // pred_region
          %s934 = ssub.s32 128, 128
          %935 = vsyncadd %s921, %s934
          %s936 = smul.addr %s38, 128
          %s937 = scalar_lea.hbm %s12, %s936
          %s939 = sshll.u32 %s924, 4
          %s940 = int_to_ptr.vmem [resolvable:$true] %s939
          %942 = dma.vmem_to_hbm [thread:$0]  %s940, 128, %s937, %s921
        $region92: #{tpu_custom_call.1} parent=67 // pred_fallthru
          _
        // Predicated region
        $region93: #{tpu_custom_call.1} parent=67 // pred_check
          %p943 = pneg %p344
        $region94: #{tpu_custom_call.1} parent=67 // pred_check_branch
          %945 = sbr.rel (%p943) target = $region96
        $region95: #{tpu_custom_call.1} parent=67 // pred_region
          %s947 = ssub.s32 128, 128
          %948 = vsyncadd %s926, %s947
          %s949 = smul.addr %s38, 128
          %s950 = scalar_lea.hbm %s13, %s949
          %s952 = sshll.u32 %s929, 4
          %s953 = int_to_ptr.vmem [resolvable:$true] %s952
          %955 = dma.vmem_to_hbm [thread:$0]  %s953, 128, %s950, %s926
        $region96: #{tpu_custom_call.1} parent=67 // pred_fallthru
          _
      $region68: #{tpu_custom_call.1} parent=5 // pred_fallthru
        _
      %p956 = scmp.le.s32.totalorder 2, %s33
      // Predicated region
      $region97: #{tpu_custom_call.1} parent=5 // pred_check
        %p957 = pneg %p956
      $region98: #{tpu_custom_call.1} parent=5 // pred_check_branch
        %959 = sbr.rel (%p957) target = $region100
      $region99: #{tpu_custom_call.1} parent=5 // pred_region
        %s960 = ssub.s32 %s33, 2
        // Predicated region
        $region101: #{tpu_custom_call.1} parent=99 // pred_check
          %p961 = pneg %p324
        $region102: #{tpu_custom_call.1} parent=99 // pred_check_branch
          %963 = sbr.rel (%p961) target = $region104
        $region103: #{tpu_custom_call.1} parent=99 // pred_region
          %s964 = sand.u32 %s309, 1
          %s965 = scalar_lea.sflag [#allocation4], %s964
          %s966 = sand.u32 %s309, 1
          %s967 = smul.addr %s966, 8
          %s968 = scalar_lea.vmem [#allocation11], %s967
          %969 = dma.done %s965, 128
        $region104: #{tpu_custom_call.1} parent=99 // pred_fallthru
          _
        // Predicated region
        $region105: #{tpu_custom_call.1} parent=99 // pred_check
          %p970 = pneg %p350
        $region106: #{tpu_custom_call.1} parent=99 // pred_check_branch
          %972 = sbr.rel (%p970) target = $region108
        $region107: #{tpu_custom_call.1} parent=99 // pred_region
          %s973 = sand.u32 %s335, 1
          %s974 = scalar_lea.sflag [#allocation13], %s973
          %s975 = sand.u32 %s335, 1
          %s976 = smul.addr %s975, 8
          %s977 = scalar_lea.vmem [#allocation12], %s976
          %978 = dma.done %s974, 128
        $region108: #{tpu_custom_call.1} parent=99 // pred_fallthru
          _
      $region100: #{tpu_custom_call.1} parent=5 // pred_fallthru
        _
    $region6: #{tpu_custom_call.1} parent=1 // loop_footer
      %s37 = sadd.s32 1, %s33
    $region7: #{tpu_custom_call.1} parent=1 // loop_footer_branch
      %32 = sbr.rel target = $region3
    $region8: #{tpu_custom_call.1} parent=1 // loop_exit
      _
    %979 = vsyncpa [#allocation3], 1
    %s980 = scalar_lea.sflag [#allocation3], 1
    %981 = vsyncpa %s980, 1
    %982 = vsyncpa [#allocation6], 1
    %s983 = scalar_lea.sflag [#allocation6], 1
    %984 = vsyncpa %s983, 1
    %985 = vsyncpa [#allocation9], 1
    %986 = vsyncpa [#allocation4], 1
    %s987 = scalar_lea.sflag [#allocation4], 1
    %988 = vsyncpa %s987, 1
    %989 = vsyncpa [#allocation13], 1
    %s990 = scalar_lea.sflag [#allocation13], 1
    %991 = vsyncpa %s990, 1

</llo_original>
